<compile_context>
chip_gen: v7x
topology: tpu7x:2x2x1
jax: 0.10.0
libtpu: 0.0.40
codegen_flags: <defaults>
</compile_context>

<pallas_src>
import functools

import numpy as np

import jax
import jax.numpy as jnp
from jax.experimental import pallas as pl
from jax.experimental.pallas import tpu as pltpu


def _round_up(a, m):
    return -(-a // m) * m


def _downsample_kernel(x_ref, mh_ref, o_ref, tmp_ref, *, tv, down, pad0, hk, top):
    """Two-pass separable blur + decimation.

    x_ref  : (bb*hk, W)      hk rows per image (bottom rows zero-padded to 8-mult)
    mh_ref : (W, out_w)      constant banded matrix: horiz blur + W-pad + decimate
    o_ref  : (bb, out_h, out_w)
    tmp_ref: (bb, T, out_w)  f32 staging scratch carrying the vertical zero padding
    """
    bb, out_h, out_w = o_ref.shape
    t_rows = tmp_ref.shape[1]

    # ---- Pass 1: horizontal blur + decimate on the MXU (otherwise idle here). ----
    hb = jnp.dot(x_ref[...], mh_ref[...], preferred_element_type=jnp.float32)

    # ---- Stage into the f32 scratch surrounded by the vertical zero padding. ----
    # Data sits at rows [top, top+hk)  (top % 8 == 0, hk % 8 == 0 -> aligned store);
    # rows [0, top) and [top+hk, T) are re-zeroed every step (a handful of rows, and
    # safe under megacore "parallel" sharding, unlike a program_id==0 one-time init).
    if top > 0:
        tmp_ref[:, pl.ds(0, top), :] = jnp.zeros((bb, top, out_w), jnp.float32)
    tail = t_rows - (top + hk)
    if tail > 0:
        tmp_ref[:, pl.ds(top + hk, tail), :] = jnp.zeros((bb, tail, out_w), jnp.float32)
    tmp_ref[:, pl.ds(top, hk), :] = hb.reshape(bb, hk, out_w)

    # ---- Pass 2: vertical blur + decimate: strided sublane reads + f32 VPU FMA. ----
    acc = jnp.zeros((bb, out_h, out_w), jnp.float32)
    for ky, wt in enumerate(tv):
        if wt == 0.0:
            continue  # skip zero taps at compile time
        acc = acc + tmp_ref[:, pl.ds(top - pad0 + ky, out_h, stride=down), :] * wt
    o_ref[...] = acc.astype(o_ref.dtype)


def downsample(x, kernel=(1, 3, 3, 1), factor=2, *, max_block_b=None):
    """Pallas TPU forward of Downsample:
    upfirdn2d(x, make_kernel(kernel), up=1, down=factor, pad=(pad0, pad1)).
    x: (N, C, H, W)."""
    N, C, H, W = x.shape
    down = int(factor)
    isz = x.dtype.itemsize

    k1 = np.asarray(kernel, dtype=np.float64)
    if k1.ndim != 1:
        # TODO(synk): non-separable 2D blur kernels (make_kernel built from a 1D tap
        # list is always separable) would need a tap-loop kernel instead of 2 passes.
        raise NotImplementedError("downsample: only 1D (separable) blur kernels supported")
    kh = kw = int(k1.shape[0])
    s = float(k1.sum())
    # upfirdn2d convolves with the flipped, normalized kernel -> bake flipped taps,
    # split into separable vertical / horizontal factors (each sums to 1).
    tv = tuple(float(k1[kh - 1 - i]) / s for i in range(kh))
    tw = tuple(float(k1[kw - 1 - i]) / s for i in range(kw))

    # Same padding rule as the module (derived from kernel length, applied to H and W).
    p = kh - down
    pad0, pad1 = (p + 1) // 2, p // 2
    out_h = (H + pad0 + pad1 - kh) // down + 1
    out_w = (W + pad0 + pad1 - kw) // down + 1

    B = N * C
    # Rows per image padded to a sublane multiple so (bb*Hk, W) blocks stay 8-aligned
    # and the in-kernel (bb*Hk, out_w) -> (bb, Hk, out_w) reshape is a free relayout.
    Hk = _round_up(H, 8)
    # Staging scratch layout: data rows at [top, top+Hk), zero padding around them.
    top = _round_up(pad0, 8)
    T = _round_up(max(top + Hk, top + H + pad1), 8)

    # Horizontal blur + W zero-pad + stride-`down` decimation as one constant banded
    # matrix: the lane-dim decimation becomes a plain MXU matmul (no strided lane
    # loads, no HBM polyphase intermediate).
    mh_np = np.zeros((W, out_w), np.float32)
    for j in range(out_w):
        for kx in range(kw):
            wsrc = down * j + kx - pad0
            if 0 <= wsrc < W:
                mh_np[wsrc, j] = tw[kx]
    mh = jnp.asarray(mh_np, dtype=x.dtype)

    # ---- VMEM-budgeted batch block size (adaptive bb + vmem_limit_bytes). ----
    vmem_cap = 64 << 20  # v7x per-TC VMEM: smallest in the fleet
    try:
        vmem_cap = int(getattr(pltpu.get_tpu_info(), "vmem_capacity_bytes", vmem_cap))
    except Exception:
        pass
    budget = max(min(vmem_cap // 4, 32 << 20), 4 << 20)

    w_lane = _round_up(W, 128)
    ow_lane = _round_up(out_w, 128)
    oh8 = _round_up(out_h, 8)
    per_img = (2 * Hk * w_lane * isz          # input block (double-buffered)
               + 2 * oh8 * ow_lane * isz      # output block (double-buffered)
               + T * ow_lane * 4              # f32 staging scratch
               + Hk * ow_lane * 4             # transient matmul result
               + oh8 * ow_lane * 4)           # transient f32 accumulator
    fixed = 2 * _round_up(W, 8) * ow_lane * isz  # resident blur matrix
    bb_cap = max(1, (budget - fixed) // per_img)
    if max_block_b is not None:
        bb_cap = min(bb_cap, int(max_block_b))
    if B >= 2:
        bb_cap = min(bb_cap, B // 2)  # >= 2 grid steps: megacore sharding + pipelining
    bb_cap = max(1, min(bb_cap, B))
    bb = 1
    for cand in range(bb_cap, 0, -1):  # largest divisor of B: no batch padding,
        if B % cand == 0:              # no out[:B] slice afterwards
            bb = cand
            break
    # TODO(synk): images whose single-image footprint exceeds the VMEM budget would
    # additionally need an H-tiling grid axis; bb=1 is the floor here.

    footprint = fixed + bb * per_img
    vmem_limit = int(min(max(footprint * 3 // 2, 16 << 20), 128 << 20))

    # Input prep: pure reshape (free).  Only pads when H is not a multiple of 8;
    # those zero rows double as part of the vertical zero padding.
    x3 = x.reshape(B, H, W)
    if Hk != H:
        x3 = jnp.pad(x3, ((0, 0), (0, Hk - H), (0, 0)))
    x2 = x3.reshape(B * Hk, W)

    kern = functools.partial(
        _downsample_kernel, tv=tv, down=down, pad0=pad0, hk=Hk, top=top
    )

    nz_v = sum(1 for wt in tv if wt != 0.0)
    flops = 2 * B * Hk * W * out_w + 2 * B * out_h * out_w * nz_v
    bytes_accessed = (B * Hk * W + B * out_h * out_w) * isz + W * out_w * isz

    out3 = pl.pallas_call(
        kern,
        out_shape=jax.ShapeDtypeStruct((B, out_h, out_w), x.dtype),
        grid=(B // bb,),
        in_specs=[
            pl.BlockSpec((bb * Hk, W), lambda i: (i, 0)),
            pl.BlockSpec((W, out_w), lambda i: (0, 0)),  # constant block: stays resident
        ],
        out_specs=pl.BlockSpec((bb, out_h, out_w), lambda i: (i, 0, 0)),
        scratch_shapes=[pltpu.VMEM((bb, T, out_w), jnp.float32)],
        compiler_params=pltpu.CompilerParams(
            dimension_semantics=("parallel",),
            vmem_limit_bytes=vmem_limit,
        ),
        cost_estimate=pl.CostEstimate(
            flops=int(flops), transcendentals=0, bytes_accessed=int(bytes_accessed)
        ),
    )(x2, mh)

    return out3.reshape(N, C, out_h, out_w)


def _reference_downsample(x, kernel=(1, 3, 3, 1), factor=2):
    """Plain-JAX, exact-f32 (element-wise only) upfirdn2d(up=1, down=factor) reference."""
    N, C, H, W = x.shape
    k = jnp.asarray(kernel, jnp.float32)
    k2d = jnp.outer(k, k) if k.ndim == 1 else k
    k2d = k2d / jnp.sum(k2d)
    kh, kw = k2d.shape
    p = kh - factor
    pad0, pad1 = (p + 1) // 2, p // 2
    out_h = (H + pad0 + pad1 - kh) // factor + 1
    out_w = (W + pad0 + pad1 - kw) // factor + 1
    xp = jnp.pad(x.astype(jnp.float32), ((0, 0), (0, 0), (pad0, pad1), (pad0, pad1)))
    kf = jnp.flip(k2d, (0, 1))  # upfirdn2d convolves with the flipped kernel
    out = jnp.zeros((N, C, out_h, out_w), jnp.float32)
    for ky in range(kh):
        for kx in range(kw):
            sub = jax.lax.slice(
                xp,
                (0, 0, ky, kx),
                (N, C, ky + factor * (out_h - 1) + 1, kx + factor * (out_w - 1) + 1),
                (1, 1, factor, factor),
            )
            out = out + kf[ky, kx] * sub
    return out.astype(x.dtype)


if __name__ == "__main__":
    key = jax.random.PRNGKey(0)
    x = jax.random.normal(key, (2, 4, 16, 16), dtype=jnp.float32)

    out = downsample(x, (1, 3, 3, 1), 2)
    out = jax.block_until_ready(out)

    ref = _reference_downsample(x, (1, 3, 3, 1), 2)

    assert out.shape == (2, 4, 8, 8), out.shape
    err = float(jnp.max(jnp.abs(out.astype(jnp.float32) - ref.astype(jnp.float32))))
    # The horizontal pass runs on the MXU; depending on the default matmul precision
    # its f32 product may be decomposed into bf16 passes, so allow a loose tolerance.
    assert err < 1e-2, err
    print("KERNEL_OK")
</pallas_src>

<mosaic_0001>
module attributes {stable_mosaic.version = 11 : i64} {
  func.func @_downsample_kernel(%arg0: i32, %arg1: memref<64x16xf32, #tpu.memory_space<vmem>>, %arg2: memref<16x8xf32, #tpu.memory_space<vmem>>, %arg3: memref<4x8x8xf32, #tpu.memory_space<vmem>>, %arg4: memref<4x32x8xf32, #tpu.memory_space<vmem>>) attributes {dimension_semantics = [#tpu.dimension_semantics<parallel>], iteration_bounds = array<i64: 2>, scalar_prefetch = 0 : i64, scratch_operands = 1 : i64, tpu.core_type = #tpu.core_type<tc>, window_params = [{transform_indices = @transform_0, window_bounds = array<i64: 64, 16>}, {pipeline_mode = #tpu.pipeline_mode<synchronous>, transform_indices = @transform_1, window_bounds = array<i64: 16, 8>}, {transform_indices = @transform_2, window_bounds = array<i64: 4, 8, 8>}]} {
    %c0 = arith.constant 0 : index
    %c0_0 = arith.constant 0 : index
    %0 = vector.load %arg1[%c0, %c0_0] : memref<64x16xf32, #tpu.memory_space<vmem>>, vector<64x16xf32>
    %c0_1 = arith.constant 0 : index
    %c0_2 = arith.constant 0 : index
    %1 = vector.load %arg2[%c0_1, %c0_2] : memref<16x8xf32, #tpu.memory_space<vmem>>, vector<16x8xf32>
    %cst = arith.constant dense<0.000000e+00> : vector<64x8xf32>
    %2 = tpu.matmul %0, %1, %cst {dimension_numbers = #tpu.dot_dimension_numbers<[1], [0], [0], [1], [0, 0, 1, 1], [], []>} : vector<64x16xf32>, vector<16x8xf32>, vector<64x8xf32> -> vector<64x8xf32>
    %cst_3 = arith.constant 0.000000e+00 : f32
    %3 = vector.broadcast %cst_3 : f32 to vector<4x8x8xf32>
    %c0_4 = arith.constant 0 : index
    %c0_5 = arith.constant 0 : index
    %c0_6 = arith.constant 0 : index
    %4 = vector.load %arg4[%c0_4, %c0_5, %c0_6] : memref<4x32x8xf32, #tpu.memory_space<vmem>>, vector<4x8x8xf32>
    tpu.vector_store %arg4[%c0_4, %c0_5, %c0_6], %3 {strides = array<i32>} : memref<4x32x8xf32, #tpu.memory_space<vmem>>, vector<4x8x8xf32>,
    %cst_7 = arith.constant 0.000000e+00 : f32
    %5 = vector.broadcast %cst_7 : f32 to vector<4x8x8xf32>
    %c0_8 = arith.constant 0 : index
    %c24 = arith.constant 24 : index
    %c0_9 = arith.constant 0 : index
    %6 = vector.load %arg4[%c0_8, %c24, %c0_9] : memref<4x32x8xf32, #tpu.memory_space<vmem>>, vector<4x8x8xf32>
    tpu.vector_store %arg4[%c0_8, %c24, %c0_9], %5 {strides = array<i32>} : memref<4x32x8xf32, #tpu.memory_space<vmem>>, vector<4x8x8xf32>,
    %7 = vector.shape_cast %2 : vector<64x8xf32> to vector<4x16x8xf32>
    %c0_10 = arith.constant 0 : index
    %c8 = arith.constant 8 : index
    %c0_11 = arith.constant 0 : index
    %8 = vector.load %arg4[%c0_10, %c8, %c0_11] : memref<4x32x8xf32, #tpu.memory_space<vmem>>, vector<4x16x8xf32>
    tpu.vector_store %arg4[%c0_10, %c8, %c0_11], %7 {strides = array<i32>} : memref<4x32x8xf32, #tpu.memory_space<vmem>>, vector<4x16x8xf32>,
    %cst_12 = arith.constant 0.000000e+00 : f32
    %9 = vector.broadcast %cst_12 : f32 to vector<4x8x8xf32>
    %c0_13 = arith.constant 0 : index
    %c7 = arith.constant 7 : index
    %c0_14 = arith.constant 0 : index
    %10 = tpu.strided_load %arg4[%c0_13, %c7, %c0_14] {strides = array<i32: 1, 2, 1>} : memref<4x32x8xf32, #tpu.memory_space<vmem>>, vector<4x8x8xf32>
    %cst_15 = arith.constant 1.250000e-01 : f32
    %11 = vector.broadcast %cst_15 : f32 to vector<4x8x8xf32>
    %12 = arith.mulf %10, %11 : vector<4x8x8xf32>
    %13 = arith.addf %9, %12 : vector<4x8x8xf32>
    %c0_16 = arith.constant 0 : index
    %c8_17 = arith.constant 8 : index
    %c0_18 = arith.constant 0 : index
    %14 = tpu.strided_load %arg4[%c0_16, %c8_17, %c0_18] {strides = array<i32: 1, 2, 1>} : memref<4x32x8xf32, #tpu.memory_space<vmem>>, vector<4x8x8xf32>
    %cst_19 = arith.constant 3.750000e-01 : f32
    %15 = vector.broadcast %cst_19 : f32 to vector<4x8x8xf32>
    %16 = arith.mulf %14, %15 : vector<4x8x8xf32>
    %17 = arith.addf %13, %16 : vector<4x8x8xf32>
    %c0_20 = arith.constant 0 : index
    %c9 = arith.constant 9 : index
    %c0_21 = arith.constant 0 : index
    %18 = tpu.strided_load %arg4[%c0_20, %c9, %c0_21] {strides = array<i32: 1, 2, 1>} : memref<4x32x8xf32, #tpu.memory_space<vmem>>, vector<4x8x8xf32>
    %cst_22 = arith.constant 3.750000e-01 : f32
    %19 = vector.broadcast %cst_22 : f32 to vector<4x8x8xf32>
    %20 = arith.mulf %18, %19 : vector<4x8x8xf32>
    %21 = arith.addf %17, %20 : vector<4x8x8xf32>
    %c0_23 = arith.constant 0 : index
    %c10 = arith.constant 10 : index
    %c0_24 = arith.constant 0 : index
    %22 = tpu.strided_load %arg4[%c0_23, %c10, %c0_24] {strides = array<i32: 1, 2, 1>} : memref<4x32x8xf32, #tpu.memory_space<vmem>>, vector<4x8x8xf32>
    %cst_25 = arith.constant 1.250000e-01 : f32
    %23 = vector.broadcast %cst_25 : f32 to vector<4x8x8xf32>
    %24 = arith.mulf %22, %23 : vector<4x8x8xf32>
    %25 = arith.addf %21, %24 : vector<4x8x8xf32>
    %c0_26 = arith.constant 0 : index
    %c0_27 = arith.constant 0 : index
    %c0_28 = arith.constant 0 : index
    %26 = vector.load %arg3[%c0_26, %c0_27, %c0_28] : memref<4x8x8xf32, #tpu.memory_space<vmem>>, vector<4x8x8xf32>
    tpu.vector_store %arg3[%c0_26, %c0_27, %c0_28], %25 {strides = array<i32>} : memref<4x8x8xf32, #tpu.memory_space<vmem>>, vector<4x8x8xf32>,
    return
  }
  func.func @transform_0(%arg0: i32) -> (i32, i32) {
    %c0_i32 = arith.constant 0 : i32
    %c0_i32_0 = arith.constant 0 : i32
    return %arg0, %c0_i32 : i32, i32
  }
  func.func @transform_1(%arg0: i32) -> (i32, i32) {
    %c0_i32 = arith.constant 0 : i32
    %c0_i32_0 = arith.constant 0 : i32
    %c0_i32_1 = arith.constant 0 : i32
    return %c0_i32, %c0_i32_0 : i32, i32
  }
  func.func @transform_2(%arg0: i32) -> (i32, i32, i32) {
    %c0_i32 = arith.constant 0 : i32
    %c0_i32_0 = arith.constant 0 : i32
    %c0_i32_1 = arith.constant 0 : i32
    return %arg0, %c0_i32, %c0_i32_0 : i32, i32, i32
  }
}

</mosaic_0001>

<llo_original>
// kernel: tpu_custom_call.1
$region0: #{tpu_custom_call.1}
  #allocation0 [shape = 'u32[]', space=smem, size = 0x4, offset = 0x4, fixed_abs, tag = 'smem constant byte address 0x4 - core index']
  #allocation1 [shape = 'u32[144,128]{1,0:T(1,128)}', space=vmem, size = 0x12000, scoped, tag = 'internal scratch']
  #allocation2 [shape = 'f32[4,32,8]{2,1,0:T(8,128)}', space=vmem, size = 0x10000, scoped, tag = 'scratch operand']
  %s0 = inlined_call_operand.vmem [shape: f32[128,16], index: 0, kind: input, shape index: {}]
  %s1 = inlined_call_operand.vmem [shape: f32[16,8], index: 1, kind: input, shape index: {}]
  %s2 = inlined_call_operand.hbm [shape: f32[8,8,8], index: 2, kind: output, shape index: {}]
  %s3 = sld [smem:[#allocation0]]
  $region41: #{tpu_custom_call.1} parent=0
    _
  %s5 = ssub.s32 1, %s3
  %s6 = scalar_select 0, %s5, %s3
  $region1: #{tpu_custom_call.1} parent=0
    #allocation3 [shape = 'u8[32768]{0}', space=vmem, size = 0x8000, scoped, tag = 'output window, operand 0']
    #allocation4 [shape = 's32[2]{0}', space=sflag, size = 0x8, scoped, tag = 'scoped memory for tpu_custom_call.1']
    %7 = vsyncpa [#allocation4], 0
    %s8 = scalar_lea.sflag [#allocation4], 1
    %9 = vsyncpa %s8, 0
    loop: start=0, step=1, limit=4
    $region2: #{tpu_custom_call.1} parent=1 // loop_pre_header
      _
    $region3: #{tpu_custom_call.1} parent=1 // loop_header
      %s11 = sphi 0, %s15
      %p12 = scmp.ge.s32.totalorder %s11, 4
      %s21 = sphi 0, %s23
      %s24 = sphi 0, %s21
      %s25 = sphi 0, %s24
      %s41 = sphi 0, %s25
      %s45 = sphi 0, %s45
      %s47 = sphi 0, %s45
      %s48 = sphi 0, %s47
      %s62 = sphi 0, %s48
      %s68 = sphi 0, %s70
      %s71 = sphi 0, %s68
      %s72 = sphi 0, %s71
      %s88 = sphi 0, %s72
    $region4: #{tpu_custom_call.1} parent=1 // loop_header_branch
      %14 = sbr.rel (%p12) target = $region8
    $region5: #{tpu_custom_call.1} parent=1 // loop_body
      %s16 = ssub.s32 %s11, 1
      %s17 = ssub.s32 %s11, 2
      %s18 = sadd.s32 %s11, 1
      %s19 = ssub.s32 %s11, %s18
      %p20 = scmp.eq.s32.totalorder %s19, 0
      %s22 = sadd.s32 %s21, 1
      %s23 = scalar_select %p20, %s21, %s22
      %p26 = pneg %p20
      %p27 = scmp.eq.s32.totalorder %s11, 1
      %p28 = por %p26, %p27
      %p29 = scmp.ne.s32.totalorder %s21, %s24
      %p30 = scmp.eq.s32.totalorder %s11, 0
      %p31 = por %p29, %p30
      %p32 = scmp.ne.s32.totalorder %s21, %s24
      %p33 = scmp.eq.s32.totalorder %s16, 1
      %p34 = por %p32, %p33
      %p35 = scmp.ne.s32.totalorder %s24, %s25
      %p36 = scmp.eq.s32.totalorder %s16, 0
      %p37 = por %p35, %p36
      %p38 = scmp.ne.s32.totalorder %s24, %s25
      %p39 = scmp.eq.s32.totalorder %s17, 1
      %p40 = por %p38, %p39
      %p42 = scmp.ne.s32.totalorder %s25, %s41
      %p43 = scmp.eq.s32.totalorder %s17, 0
      %p44 = por %p42, %p43
      %s46 = sadd.s32 %s45, 1
      %p49 = scmp.eq.s32.totalorder %s11, 1
      %p50 = scmp.ne.s32.totalorder %s45, %s47
      %p51 = scmp.eq.s32.totalorder %s11, 0
      %p52 = por %p50, %p51
      %p53 = scmp.ne.s32.totalorder %s45, %s47
      %p54 = scmp.eq.s32.totalorder %s16, 1
      %p55 = por %p53, %p54
      %p56 = scmp.ne.s32.totalorder %s47, %s48
      %p57 = scmp.eq.s32.totalorder %s16, 0
      %p58 = por %p56, %p57
      %p59 = scmp.ne.s32.totalorder %s47, %s48
      %p60 = scmp.eq.s32.totalorder %s17, 1
      %p61 = por %p59, %p60
      %p63 = scmp.ne.s32.totalorder %s48, %s62
      %p64 = scmp.eq.s32.totalorder %s17, 0
      %p65 = por %p63, %p64
      %s66 = ssub.s32 %s11, %s18
      %p67 = scmp.eq.s32.totalorder %s66, 0
      %s69 = sadd.s32 %s68, 1
      %s70 = scalar_select %p67, %s68, %s69
      %p73 = pneg %p67
      %p74 = scmp.eq.s32.totalorder %s11, 1
      %p75 = por %p73, %p74
      %p76 = scmp.ne.s32.totalorder %s68, %s71
      %p77 = scmp.eq.s32.totalorder %s11, 0
      %p78 = por %p76, %p77
      %p79 = scmp.ne.s32.totalorder %s68, %s71
      %p80 = scmp.eq.s32.totalorder %s16, 1
      %p81 = por %p79, %p80
      %p82 = scmp.ne.s32.totalorder %s71, %s72
      %p83 = scmp.eq.s32.totalorder %s16, 0
      %p84 = por %p82, %p83
      %p85 = scmp.ne.s32.totalorder %s71, %s72
      %p86 = scmp.eq.s32.totalorder %s17, 1
      %p87 = por %p85, %p86
      %p89 = scmp.ne.s32.totalorder %s72, %s88
      %p90 = scmp.eq.s32.totalorder %s17, 0
      %p91 = por %p89, %p90
      %p92 = scmp.le.s32.totalorder 1, %s11
      %p93 = scmp.lt.s32.totalorder %s11, 3
      %p94 = pnand %p92, %p93
      %p95 = pneg %p94
      // Predicated region
      $region9: #{tpu_custom_call.1} parent=5 // pred_check
        _
      $region10: #{tpu_custom_call.1} parent=5 // pred_check_branch
        %97 = sbr.rel (%p94) target = $region12
      $region11: #{tpu_custom_call.1} parent=5 // pred_region
        %s98 = ssub.s32 %s11, 1
        // Predicated region
        $region13: #{tpu_custom_call.1} parent=11 // pred_check
          %p99 = pneg %p58
        $region14: #{tpu_custom_call.1} parent=11 // pred_check_branch
          %101 = sbr.rel (%p99) target = $region16
        $region15: #{tpu_custom_call.1} parent=11 // pred_region
          _
        $region16: #{tpu_custom_call.1} parent=11 // pred_fallthru
          _
      $region12: #{tpu_custom_call.1} parent=5 // pred_fallthru
        _
      %p102 = scmp.lt.s32.totalorder %s11, 2
      // Predicated region
      $region17: #{tpu_custom_call.1} parent=5 // pred_check
        %p103 = pneg %p102
      $region18: #{tpu_custom_call.1} parent=5 // pred_check_branch
        %105 = sbr.rel (%p103) target = $region20
      $region19: #{tpu_custom_call.1} parent=5 // pred_region
        // Predicated region
        $region21: #{tpu_custom_call.1} parent=19 // pred_check
          %p106 = pneg %p31
        $region22: #{tpu_custom_call.1} parent=19 // pred_check_branch
          %108 = sbr.rel (%p106) target = $region24
        $region23: #{tpu_custom_call.1} parent=19 // pred_region
          %s109 = smul.u32 8, %s11
          %p110 = scmp.lt.s32.totalorder %s109, 15
          %s111 = scalar_select %p110, %s109, 15
          %s112 = smul.addr %s111, 8
          %s113 = scalar_lea.vmem %s0, %s112
          %s114 = smul.u32 8, %s11
        $region24: #{tpu_custom_call.1} parent=19 // pred_fallthru
          _
      $region20: #{tpu_custom_call.1} parent=5 // pred_fallthru
        _
      %p115 = scmp.le.s32.totalorder 1, %s11
      %p116 = scmp.lt.s32.totalorder %s11, 3
      %p117 = pnand %p115, %p116
      %p118 = pneg %p117
      // Predicated region
      $region25: #{tpu_custom_call.1} parent=5 // pred_check
        _
      $region26: #{tpu_custom_call.1} parent=5 // pred_check_branch
        %120 = sbr.rel (%p117) target = $region28
      $region27: #{tpu_custom_call.1} parent=5 // pred_region
        %s121 = ssub.s32 %s11, 1
        %s122 = smul.u32 8, %s16
        %p123 = scmp.lt.s32.totalorder %s122, 15
        %s124 = scalar_select %p123, %s122, 15
        %s125 = smul.addr %s124, 8
        %s126 = scalar_lea.vmem %s0, %s125
        %p127 = pneg %p37
        %p128 = pneg %p34
        %p129 = pneg %p58
        %p130 = pneg %p55
        %p131 = pneg %p84
        %p132 = pneg %p81
        %s133 = sand.u32 %s71, 1
        %s134 = scalar_lea.sflag [#allocation4], %s133
        %s135 = sand.u32 %s71, 1
        %s136 = smul.addr %s135, 32
        %s137 = scalar_lea.vmem [#allocation3], %s136
        %s138 = smul.u32 8, %s16
        %p139 = scmp.lt.s32.totalorder %s138, 15
        %s140 = scalar_select %p139, %s138, 15
        %s141 = smul.addr %s140, 8
        %s142 = scalar_lea.vmem %s0, %s141
        %s143 = smul.u32 8, %s16
        %s144 = smul.u32 4, %s16
        %v145 = vld [vmem:[%s142] sm:$0xff]
        %v146 = vld [vmem:[%s142 + $0x8] sm:$0xff]
        %v147 = vld [vmem:[%s142 + $0x10] sm:$0xff]
        %v148 = vld [vmem:[%s142 + $0x18] sm:$0xff]
        %v149 = vld [vmem:[%s142 + $0x20] sm:$0xff]
        %v150 = vld [vmem:[%s142 + $0x28] sm:$0xff]
        %v151 = vld [vmem:[%s142 + $0x30] sm:$0xff]
        %v152 = vld [vmem:[%s142 + $0x38] sm:$0xff]
        %v153 = vld [vmem:[%s1] sm:$0xff]
        %v154 = vld [vmem:[%s1 + $0x8] sm:$0xff]
        %vm155 = vcmask 130048
        %v157 = vsel %vm155, %v145, 0
        %v160 = vsel %vm155, %v146, 0
        %v163 = vsel %vm155, %v147, 0
        %v166 = vsel %vm155, %v148, 0
        %v169 = vsel %vm155, %v149, 0
        %v172 = vsel %vm155, %v150, 0
        %v175 = vsel %vm155, %v151, 0
        %v178 = vsel %vm155, %v152, 0
        %180 = vmatprep.subr.mxu0 0.0
        %181 = vmatpush1.msra.mxu0 %v153
        %182 = vmatprep.subr.mxu0 0.0
        %183 = vmatpush1.msra.mxu0 %v154
        %184 = vmatprep.subr.mxu0 0.0
        %185 = vmatpush1.msra.mxu0 0.0
        %186 = vmatprep.subr.mxu0 0.0
        %187 = vmatpush1.msra.mxu0 0.0
        %188 = vmatprep.subr.mxu0 0.0
        %189 = vmatpush1.msra.mxu0 0.0
        %190 = vmatprep.subr.mxu0 0.0
        %191 = vmatpush1.msra.mxu0 0.0
        %192 = vmatprep.subr.mxu0 0.0
        %193 = vmatpush1.msra.mxu0 0.0
        %194 = vmatprep.subr.mxu0 0.0
        %195 = vmatpush1.msra.mxu0 0.0
        %196 = vmatprep.subr.mxu0 0.0
        %197 = vmatpush1.msra.mxu0 0.0
        %198 = vmatprep.subr.mxu0 0.0
        %199 = vmatpush1.msra.mxu0 0.0
        %200 = vmatprep.subr.mxu0 0.0
        %201 = vmatpush1.msra.mxu0 0.0
        %202 = vmatprep.subr.mxu0 0.0
        %203 = vmatpush1.msra.mxu0 0.0
        %204 = vmatprep.subr.mxu0 0.0
        %205 = vmatpush1.msra.mxu0 0.0
        %206 = vmatprep.subr.mxu0 0.0
        %207 = vmatpush1.msra.mxu0 0.0
        %208 = vmatprep.subr.mxu0 0.0
        %209 = vmatpush1.msra.mxu0 0.0
        %210 = vmatprep.subr.mxu0 0.0
        %211 = vmatpush1.msra.mxu0 0.0
        %212 = vmatprep.subr.mxu0 0.0
        %213 = vmatpush1.msra.mxu0 0.0
        %214 = vmatprep.subr.mxu0 0.0
        %215 = vmatpush1.msra.mxu0 0.0
        %216 = vmatprep.subr.mxu0 0.0
        %217 = vmatpush1.msra.mxu0 0.0
        %218 = vmatprep.subr.mxu0 0.0
        %219 = vmatpush1.msra.mxu0 0.0
        %220 = vmatprep.subr.mxu0 0.0
        %221 = vmatpush1.msra.mxu0 0.0
        %222 = vmatprep.subr.mxu0 0.0
        %223 = vmatpush1.msra.mxu0 0.0
        %224 = vmatprep.subr.mxu0 0.0
        %225 = vmatpush1.msra.mxu0 0.0
        %226 = vmatprep.subr.mxu0 0.0
        %227 = vmatpush1.msra.mxu0 0.0
        %228 = vmatprep.subr.mxu0 0.0
        %229 = vmatpush1.msra.mxu0 0.0
        %230 = vmatprep.subr.mxu0 0.0
        %231 = vmatpush1.msra.mxu0 0.0
        %232 = vmatprep.subr.mxu0 0.0
        %233 = vmatpush1.msra.mxu0 0.0
        %234 = vmatprep.subr.mxu0 0.0
        %235 = vmatpush1.msra.mxu0 0.0
        %236 = vmatprep.subr.mxu0 0.0
        %237 = vmatpush1.msra.mxu0 0.0
        %238 = vmatprep.subr.mxu0 0.0
        %239 = vmatpush1.msra.mxu0 0.0
        %240 = vmatprep.subr.mxu0 0.0
        %241 = vmatpush1.msra.mxu0 0.0
        %242 = vmatprep.subr.mxu0 0.0
        %243 = vmatpush1.msra.mxu0 0.0
        %244 = vmatprep.mubr.f32.mxu0 0.0
        %245 = vmatmul.mubr.f32.gmra.mrb[0].mxu0 %v157
        %v246 = vpop.f32.mrb[0].mxu0
        %v247 = vadd.f32 0.0, %v246
        %v248 = vpop.f32.mrb[0].mxu0
        %249 = vmatprep.mubr.f32.mxu0 0.0
        %250 = vmatmul.mubr.f32.gmra.mrb[0].mxu0 %v160
        %v251 = vpop.f32.mrb[0].mxu0
        %v252 = vadd.f32 0.0, %v251
        %v253 = vpop.f32.mrb[0].mxu0
        %254 = vmatprep.mubr.f32.mxu0 0.0
        %255 = vmatmul.mubr.f32.gmra.mrb[0].mxu0 %v163
        %v256 = vpop.f32.mrb[0].mxu0
        %v257 = vadd.f32 0.0, %v256
        %v258 = vpop.f32.mrb[0].mxu0
        %259 = vmatprep.mubr.f32.mxu0 0.0
        %260 = vmatmul.mubr.f32.gmra.mrb[0].mxu0 %v166
        %v261 = vpop.f32.mrb[0].mxu0
        %v262 = vadd.f32 0.0, %v261
        %v263 = vpop.f32.mrb[0].mxu0
        %264 = vmatprep.mubr.f32.mxu0 0.0
        %265 = vmatmul.mubr.f32.gmra.mrb[0].mxu0 %v169
        %v266 = vpop.f32.mrb[0].mxu0
        %v267 = vadd.f32 0.0, %v266
        %v268 = vpop.f32.mrb[0].mxu0
        %269 = vmatprep.mubr.f32.mxu0 0.0
        %270 = vmatmul.mubr.f32.gmra.mrb[0].mxu0 %v172
        %v271 = vpop.f32.mrb[0].mxu0
        %v272 = vadd.f32 0.0, %v271
        %v273 = vpop.f32.mrb[0].mxu0
        %274 = vmatprep.mubr.f32.mxu0 0.0
        %275 = vmatmul.mubr.f32.gmra.mrb[0].mxu0 %v175
        %v276 = vpop.f32.mrb[0].mxu0
        %v277 = vadd.f32 0.0, %v276
        %v278 = vpop.f32.mrb[0].mxu0
        %279 = vmatprep.mubr.f32.mxu0 0.0
        %280 = vmatmul.mubr.f32.gmra.mrb[0].mxu0 %v178
        %v281 = vpop.f32.mrb[0].mxu0
        %v282 = vadd.f32 0.0, %v281
        %v283 = vpop.f32.mrb[0].mxu0
        %284 = vdwg.mxu0
        %vm285 = vcmask 64512
        %286 = vst.msk [vmem:[#allocation2] sm:$0xff] %vm285, 0.0
        %287 = vst.msk [vmem:[#allocation2 + $0x20] sm:$0xff] %vm285, 0.0
        %288 = vst.msk [vmem:[#allocation2 + $0x40] sm:$0xff] %vm285, 0.0
        %289 = vst.msk [vmem:[#allocation2 + $0x60] sm:$0xff] %vm285, 0.0
        %290 = vst.msk [vmem:[#allocation2 + $0x18] sm:$0xff] %vm285, 0.0
        %291 = vst.msk [vmem:[#allocation2 + $0x38] sm:$0xff] %vm285, 0.0
        %292 = vst.msk [vmem:[#allocation2 + $0x58] sm:$0xff] %vm285, 0.0
        %293 = vst.msk [vmem:[#allocation2 + $0x78] sm:$0xff] %vm285, 0.0
        %294 = vst.msk [vmem:[#allocation2 + $0x8] sm:$0xff] %vm285, %v247
        %295 = vst.msk [vmem:[#allocation2 + $0x10] sm:$0xff] %vm285, %v252
        %296 = vst.msk [vmem:[#allocation2 + $0x28] sm:$0xff] %vm285, %v257
        %297 = vst.msk [vmem:[#allocation2 + $0x30] sm:$0xff] %vm285, %v262
        %298 = vst.msk [vmem:[#allocation2 + $0x48] sm:$0xff] %vm285, %v267
        %299 = vst.msk [vmem:[#allocation2 + $0x50] sm:$0xff] %vm285, %v272
        %300 = vst.msk [vmem:[#allocation2 + $0x68] sm:$0xff] %vm285, %v277
        %301 = vst.msk [vmem:[#allocation2 + $0x70] sm:$0xff] %vm285, %v282
        %s302 = scalar_lea.vmem [#allocation2], 7
        %v303 = vld [vmem:[%s302] ss:$2 sm:$0xff]
        %s304 = scalar_lea.vmem [#allocation2], 39
        %v305 = vld [vmem:[%s304] ss:$2 sm:$0xff]
        %s306 = scalar_lea.vmem [#allocation2], 71
        %v307 = vld [vmem:[%s306] ss:$2 sm:$0xff]
        %s308 = scalar_lea.vmem [#allocation2], 103
        %v309 = vld [vmem:[%s308] ss:$2 sm:$0xff]
        %v310 = vmul.f32 %v303, 0.125
        %v311 = vmul.f32 %v305, 0.125
        %v312 = vmul.f32 %v307, 0.125
        %v313 = vmul.f32 %v309, 0.125
        %v314 = vadd.f32 %v310, 0.0
        %v315 = vadd.f32 %v311, 0.0
        %v316 = vadd.f32 %v312, 0.0
        %v317 = vadd.f32 %v313, 0.0
        %s318 = scalar_lea.vmem [#allocation2], 8
        %v319 = vld [vmem:[%s318] ss:$2 sm:$0xff]
        %s320 = scalar_lea.vmem [#allocation2], 40
        %v321 = vld [vmem:[%s320] ss:$2 sm:$0xff]
        %s322 = scalar_lea.vmem [#allocation2], 72
        %v323 = vld [vmem:[%s322] ss:$2 sm:$0xff]
        %s324 = scalar_lea.vmem [#allocation2], 104
        %v325 = vld [vmem:[%s324] ss:$2 sm:$0xff]
        %v326 = vmul.f32 %v319, 0.375
        %v327 = vmul.f32 %v321, 0.375
        %v328 = vmul.f32 %v323, 0.375
        %v329 = vmul.f32 %v325, 0.375
        %v330 = vadd.f32 %v314, %v326
        %v331 = vadd.f32 %v315, %v327
        %v332 = vadd.f32 %v316, %v328
        %v333 = vadd.f32 %v317, %v329
        %s334 = scalar_lea.vmem [#allocation2], 9
        %v335 = vld [vmem:[%s334] ss:$2 sm:$0xff]
        %s336 = scalar_lea.vmem [#allocation2], 41
        %v337 = vld [vmem:[%s336] ss:$2 sm:$0xff]
        %s338 = scalar_lea.vmem [#allocation2], 73
        %v339 = vld [vmem:[%s338] ss:$2 sm:$0xff]
        %s340 = scalar_lea.vmem [#allocation2], 105
        %v341 = vld [vmem:[%s340] ss:$2 sm:$0xff]
        %v342 = vmul.f32 %v335, 0.375
        %v343 = vmul.f32 %v337, 0.375
        %v344 = vmul.f32 %v339, 0.375
        %v345 = vmul.f32 %v341, 0.375
        %v346 = vadd.f32 %v330, %v342
        %v347 = vadd.f32 %v331, %v343
        %v348 = vadd.f32 %v332, %v344
        %v349 = vadd.f32 %v333, %v345
        %s350 = scalar_lea.vmem [#allocation2], 10
        %v351 = vld [vmem:[%s350] ss:$2 sm:$0xff]
        %s352 = scalar_lea.vmem [#allocation2], 42
        %v353 = vld [vmem:[%s352] ss:$2 sm:$0xff]
        %s354 = scalar_lea.vmem [#allocation2], 74
        %v355 = vld [vmem:[%s354] ss:$2 sm:$0xff]
        %s356 = scalar_lea.vmem [#allocation2], 106
        %v357 = vld [vmem:[%s356] ss:$2 sm:$0xff]
        %v358 = vmul.f32 %v351, 0.125
        %v359 = vmul.f32 %v353, 0.125
        %v360 = vmul.f32 %v355, 0.125
        %v361 = vmul.f32 %v357, 0.125
        %v362 = vadd.f32 %v346, %v358
        %v363 = vadd.f32 %v347, %v359
        %v364 = vadd.f32 %v348, %v360
        %v365 = vadd.f32 %v349, %v361
        %366 = vst.msk [vmem:[%s137] sm:$0xff] %vm285, %v362
        %367 = vst.msk [vmem:[%s137 + $0x8] sm:$0xff] %vm285, %v363
        %368 = vst.msk [vmem:[%s137 + $0x10] sm:$0xff] %vm285, %v364
        %369 = vst.msk [vmem:[%s137 + $0x18] sm:$0xff] %vm285, %v365
        %s370 = sand.u32 %s71, 1
        %s371 = scalar_lea.sflag [#allocation4], %s370
        %s372 = sand.u32 %s71, 1
        %s373 = smul.addr %s372, 32
        %s374 = scalar_lea.vmem [#allocation3], %s373
        // Predicated region
        $region29: #{tpu_custom_call.1} parent=27 // pred_check
          %p375 = pneg %p81
        $region30: #{tpu_custom_call.1} parent=27 // pred_check_branch
          %377 = sbr.rel (%p375) target = $region32
        $region31: #{tpu_custom_call.1} parent=27 // pred_region
          %s378 = smul.u32 4, %s16
          %s380 = ssub.s32 512, 512
          %381 = vsyncadd %s371, %s380
          %s382 = smul.addr %s378, 128
          %s383 = scalar_lea.hbm %s2, %s382
          %s384 = sshll.u32 %s374, 4
          %s385 = int_to_ptr.vmem [resolvable:$true] %s384
          %390 = dma.vmem_to_hbm [thread:$0]  %s385, 512, %s383, %s371, 128, 128, 8
        $region32: #{tpu_custom_call.1} parent=27 // pred_fallthru
          _
      $region28: #{tpu_custom_call.1} parent=5 // pred_fallthru
        _
      %p391 = scmp.le.s32.totalorder 2, %s11
      // Predicated region
      $region33: #{tpu_custom_call.1} parent=5 // pred_check
        %p392 = pneg %p391
      $region34: #{tpu_custom_call.1} parent=5 // pred_check_branch
        %394 = sbr.rel (%p392) target = $region36
      $region35: #{tpu_custom_call.1} parent=5 // pred_region
        %s395 = ssub.s32 %s11, 2
        // Predicated region
        $region37: #{tpu_custom_call.1} parent=35 // pred_check
          %p396 = pneg %p87
        $region38: #{tpu_custom_call.1} parent=35 // pred_check_branch
          %398 = sbr.rel (%p396) target = $region40
        $region39: #{tpu_custom_call.1} parent=35 // pred_region
          %s399 = sand.u32 %s72, 1
          %s400 = scalar_lea.sflag [#allocation4], %s399
          %s401 = sand.u32 %s72, 1
          %s402 = smul.addr %s401, 32
          %s403 = scalar_lea.vmem [#allocation3], %s402
          %404 = dma.done %s400, 512
        $region40: #{tpu_custom_call.1} parent=35 // pred_fallthru
          _
      $region36: #{tpu_custom_call.1} parent=5 // pred_fallthru
        _
    $region6: #{tpu_custom_call.1} parent=1 // loop_footer
      %s15 = sadd.s32 1, %s11
    $region7: #{tpu_custom_call.1} parent=1 // loop_footer_branch
      %10 = sbr.rel target = $region3
    $region8: #{tpu_custom_call.1} parent=1 // loop_exit
      _
    %405 = vsyncpa [#allocation4], 1
    %s406 = scalar_lea.sflag [#allocation4], 1
    %407 = vsyncpa %s406, 1

</llo_original>
